<compile_context>
chip_gen: v7x
topology: tpu7x:2x2x1
jax: 0.10.0
libtpu: 0.0.40
codegen_flags: <defaults>
</compile_context>

<pallas_src>
import functools

import jax
import jax.numpy as jnp
from jax.experimental import pallas as pl
from jax.experimental.pallas import tpu as pltpu

_LANE = 128      # lane width for padded *hidden* dims (VMEM-only)
_SUBLANE = 8     # f32 sublane granularity for the batch axis


def _ceil_to(n: int, m: int) -> int:
    return ((n + m - 1) // m) * m


def _activation_fn(name: str):
    table = {
        "relu": lambda x: jnp.maximum(x, 0.0),
        "tanh": jnp.tanh,
        "sigmoid": jax.nn.sigmoid,
        "elu": jax.nn.elu,
        "gelu": jax.nn.gelu,
        "silu": jax.nn.silu,
        "leakyrelu": lambda x: jax.nn.leaky_relu(x, negative_slope=0.01),
        "softplus": jax.nn.softplus,
        "identity": lambda x: x,
    }
    key = name.lower()
    if key not in table:
        # Unknown strings error loudly instead of silently becoming identity.
        raise ValueError(f"Unsupported activation for Pallas Policy kernel: {name!r}")
    return table[key]


def _pad2d(x, rows: int, cols: int):
    pr, pc = rows - x.shape[0], cols - x.shape[1]
    if pr or pc:
        x = jnp.pad(x, ((0, pr), (0, pc)))
    return x


# --------------------------------------------------------------------------
# One-time parameter preparation (hoisted out of the per-call forward path).
# --------------------------------------------------------------------------
def prepare_policy_params(weights, biases, *, param_dtype=jnp.float32):
    """Pad hidden feature dims to 128 lanes and cast params once.

    weights[i]: (in_dim, out_dim) float32 (transposed vs. PyTorch)
    biases[i]:  (1, out_dim) float32

    The first layer's input rows and the last layer's output columns are kept
    at their natural width (obs_dim / action_dim) so obs and q-values cross
    HBM unpadded.  Hidden dims are zero-padded to 128; padded hidden columns
    produce activation(0) values that are cancelled because the *next*
    layer's corresponding weight rows are zero-padded.
    """
    num_layers = len(weights)
    w_p, b_p = [], []
    for i, (w, b) in enumerate(zip(weights, biases)):
        in_dim, out_dim = w.shape
        rows = in_dim if i == 0 else _ceil_to(in_dim, _LANE)
        cols = out_dim if i == num_layers - 1 else _ceil_to(out_dim, _LANE)
        w_p.append(_pad2d(w, rows, cols).astype(param_dtype))
        b_p.append(_pad2d(b.reshape(1, -1), 1, cols).astype(param_dtype))
    return w_p, b_p


# --------------------------------------------------------------------------
# Kernel: fully fused MLP forward on one batch tile.
# --------------------------------------------------------------------------
def _mlp_kernel(num_layers, act_fn, *refs):
    """refs = (x, w0, b0, w1, b1, ..., out)."""
    x_ref = refs[0]
    out_ref = refs[-1]
    param_refs = refs[1:-1]

    h = x_ref[...]
    for layer in range(num_layers):
        w = param_refs[2 * layer][...]
        b = param_refs[2 * layer + 1][...]
        # MXU matmul, always f32 accumulation.  h.astype(w.dtype) is a no-op
        # when params are f32; for bf16 params only the activations are cast
        # in-kernel (weights were pre-cast once in the wrapper).
        h = jnp.dot(h.astype(w.dtype), w,
                    preferred_element_type=jnp.float32) + b.astype(jnp.float32)
        if layer < num_layers - 1:  # final Linear has no activation (matches Policy)
            h = act_fn(h)
    out_ref[...] = h.astype(out_ref.dtype)


# --------------------------------------------------------------------------
# Per-call forward wrapper (jitted; shapes drive all tiling decisions).
# --------------------------------------------------------------------------
@functools.partial(jax.jit, static_argnames=("activation", "batch_block"))
def policy_forward(obs, weights, biases, activation="ReLU", *, batch_block=2048):
    """Run the Policy MLP forward pass as a single fused Pallas kernel.

    obs:     (batch, obs_dim) float32
    weights: prepared list of (in_dim, out_dim)   (see prepare_policy_params)
    biases:  prepared list of (1, out_dim)
    """
    num_layers = len(weights)
    act_fn = _activation_fn(activation)
    batch, obs_dim = obs.shape
    assert weights[0].shape[0] == obs_dim, "obs_dim mismatch with prepared params"
    action_dim = weights[-1].shape[1]

    # ---- adaptive batch tiling -------------------------------------------
    assert batch_block % _SUBLANE == 0
    batch_pad8 = _ceil_to(batch, _SUBLANE)
    use_grid = batch_pad8 > batch_block
    if use_grid:
        n_steps = pl.cdiv(batch_pad8, batch_block)
        # Even step count -> "parallel" batch axis splits evenly across v7x's
        # two TensorCores (no-op cost on v5e/v6e since bb shrinks to match).
        if n_steps % 2:
            n_steps += 1
        bb = _ceil_to(pl.cdiv(batch_pad8, n_steps), _SUBLANE)
        batch_pad = bb * n_steps
    else:
        bb = batch_pad8
        batch_pad = batch_pad8

    # Only the batch (row) axis is padded; lanes stay at natural obs_dim.
    obs_p = _pad2d(obs.astype(weights[0].dtype), batch_pad, obs_dim)

    args = [obs_p]
    for w, b in zip(weights, biases):
        args.append(w)
        args.append(b)

    kernel = functools.partial(_mlp_kernel, num_layers, act_fn)
    out_shape = jax.ShapeDtypeStruct((batch_pad, action_dim), jnp.float32)

    flops = 2 * batch_pad * sum(w.shape[0] * w.shape[1] for w in weights)
    bytes_accessed = int(sum(a.size * a.dtype.itemsize for a in args)
                         + batch_pad * action_dim * 4)
    cost = pl.CostEstimate(flops=flops, transcendentals=0,
                           bytes_accessed=bytes_accessed)

    if not use_grid:
        # Small problem: no grid, no pipelining machinery, everything VMEM-resident.
        out = pl.pallas_call(
            kernel,
            out_shape=out_shape,
            in_specs=[pl.BlockSpec(memory_space=pltpu.MemorySpace.VMEM)
                      for _ in args],
            out_specs=pl.BlockSpec(memory_space=pltpu.MemorySpace.VMEM),
            cost_estimate=cost,
        )(*args)
    else:
        # Batch-tiled grid; weights/biases stay VMEM-resident (constant index maps).
        # obs block (bb, obs_dim): last dim equals the full array dim -> legal
        # without lane padding, so only real bytes cross HBM.
        in_specs = [pl.BlockSpec((bb, obs_dim), lambda i: (i, 0))]
        for w, b in zip(weights, biases):
            in_specs.append(pl.BlockSpec(w.shape, lambda i: (0, 0)))
            in_specs.append(pl.BlockSpec(b.shape, lambda i: (0, 0)))
        out_specs = pl.BlockSpec((bb, action_dim), lambda i: (i, 0))

        out = pl.pallas_call(
            kernel,
            out_shape=out_shape,
            grid=(batch_pad // bb,),
            in_specs=in_specs,
            out_specs=out_specs,
            compiler_params=pltpu.CompilerParams(
                dimension_semantics=("parallel",)),
            cost_estimate=cost,
        )(*args)

    return out[:batch]


# --------------------------------------------------------------------------
# Param init (PyTorch nn.Linear-style uniform) + pure-JAX reference.
# --------------------------------------------------------------------------
def init_policy_params(key, obs_dim, action_dim, hidden_layers):
    dims = [obs_dim] + list(hidden_layers) + [action_dim]
    weights, biases = [], []
    for i in range(len(dims) - 1):
        fan_in, fan_out = dims[i], dims[i + 1]
        key, kw, kb = jax.random.split(key, 3)
        bound = 1.0 / jnp.sqrt(jnp.float32(fan_in))
        # stored as (in_dim, out_dim) so the kernel does x @ W + b
        w = jax.random.uniform(kw, (fan_in, fan_out), jnp.float32, -bound, bound)
        b = jax.random.uniform(kb, (1, fan_out), jnp.float32, -bound, bound)
        weights.append(w)
        biases.append(b)
    return weights, biases


def _reference_forward(obs, weights, biases, activation):
    act_fn = _activation_fn(activation)
    h = obs
    for i, (w, b) in enumerate(zip(weights, biases)):
        h = h @ w + b
        if i < len(weights) - 1:
            h = act_fn(h)
    return h


if __name__ == "__main__":
    # Small shapes consistent with Policy(obs_dim, action_dim, lr, hidden_layers, activation)
    batch = 8
    obs_dim = 16
    action_dim = 4
    hidden_layers = [32, 32]
    activation = "ReLU"

    key = jax.random.PRNGKey(0)
    key, k_obs, k_big = jax.random.split(key, 3)
    obs = jax.random.normal(k_obs, (batch, obs_dim), dtype=jnp.float32)
    weights, biases = init_policy_params(key, obs_dim, action_dim, hidden_layers)

    # One-time parameter prep (hidden-dim padding; optionally bf16 cast here).
    w_p, b_p = prepare_policy_params(weights, biases)

    # Small batch -> no-grid fully-fused VMEM path.
    q_values = jax.block_until_ready(policy_forward(obs, w_p, b_p, activation))
    ref = _reference_forward(obs, weights, biases, activation)
    assert q_values.shape == (batch, action_dim)
    assert jnp.allclose(q_values, ref, atol=1e-5, rtol=1e-5)

    # Non-ReLU activation exercises the padded-hidden-column cancellation path.
    q_tanh = jax.block_until_ready(policy_forward(obs, w_p, b_p, "Tanh"))
    ref_tanh = _reference_forward(obs, weights, biases, "Tanh")
    assert jnp.allclose(q_tanh, ref_tanh, atol=1e-5, rtol=1e-5)

    # Larger, non-aligned batch -> exercises the batch-tiled "parallel" grid path
    # (adaptive bb, even grid length for v7x's two TensorCores).
    big_batch = 4104
    obs_big = jax.random.normal(k_big, (big_batch, obs_dim), dtype=jnp.float32)
    q_big = jax.block_until_ready(policy_forward(obs_big, w_p, b_p, activation))
    ref_big = _reference_forward(obs_big, weights, biases, activation)
    assert q_big.shape == (big_batch, action_dim)
    assert jnp.allclose(q_big, ref_big, atol=1e-5, rtol=1e-5)

    # TODO(synk): Adam optimizer state/step and .to(device) from the PyTorch module
    # are training-side machinery with no kernel equivalent; only forward is implemented.
    print("KERNEL_OK")
</pallas_src>

<mosaic_0001>
module attributes {stable_mosaic.version = 11 : i64} {
  func.func @_mlp_kernel(%arg0: memref<8x16xf32, #tpu.memory_space<vmem>>, %arg1: memref<16x128xf32, #tpu.memory_space<vmem>>, %arg2: memref<1x128xf32, #tpu.memory_space<vmem>>, %arg3: memref<128x128xf32, #tpu.memory_space<vmem>>, %arg4: memref<1x128xf32, #tpu.memory_space<vmem>>, %arg5: memref<128x4xf32, #tpu.memory_space<vmem>>, %arg6: memref<1x4xf32, #tpu.memory_space<vmem>>, %arg7: memref<8x4xf32, #tpu.memory_space<vmem>>) attributes {dimension_semantics = [], scalar_prefetch = 0 : i64, scratch_operands = 0 : i64, tpu.core_type = #tpu.core_type<tc>} {
    %c0 = arith.constant 0 : index
    %c0_0 = arith.constant 0 : index
    %0 = vector.load %arg0[%c0, %c0_0] : memref<8x16xf32, #tpu.memory_space<vmem>>, vector<8x16xf32>
    %c0_1 = arith.constant 0 : index
    %c0_2 = arith.constant 0 : index
    %1 = vector.load %arg1[%c0_1, %c0_2] : memref<16x128xf32, #tpu.memory_space<vmem>>, vector<16x128xf32>
    %c0_3 = arith.constant 0 : index
    %c0_4 = arith.constant 0 : index
    %2 = vector.load %arg2[%c0_3, %c0_4] : memref<1x128xf32, #tpu.memory_space<vmem>>, vector<1x128xf32>
    %cst = arith.constant dense<0.000000e+00> : vector<8x128xf32>
    %3 = tpu.matmul %0, %1, %cst {dimension_numbers = #tpu.dot_dimension_numbers<[1], [0], [0], [1], [0, 0, 1, 1], [], []>} : vector<8x16xf32>, vector<16x128xf32>, vector<8x128xf32> -> vector<8x128xf32>
    %4 = vector.broadcast %2 : vector<1x128xf32> to vector<8x128xf32>
    %5 = arith.addf %3, %4 : vector<8x128xf32>
    %cst_5 = arith.constant 0.000000e+00 : f32
    %6 = vector.broadcast %cst_5 : f32 to vector<8x128xf32>
    %7 = arith.maximumf %5, %6 : vector<8x128xf32>
    %c0_6 = arith.constant 0 : index
    %c0_7 = arith.constant 0 : index
    %8 = vector.load %arg3[%c0_6, %c0_7] : memref<128x128xf32, #tpu.memory_space<vmem>>, vector<128x128xf32>
    %c0_8 = arith.constant 0 : index
    %c0_9 = arith.constant 0 : index
    %9 = vector.load %arg4[%c0_8, %c0_9] : memref<1x128xf32, #tpu.memory_space<vmem>>, vector<1x128xf32>
    %cst_10 = arith.constant dense<0.000000e+00> : vector<8x128xf32>
    %10 = tpu.matmul %7, %8, %cst_10 {dimension_numbers = #tpu.dot_dimension_numbers<[1], [0], [0], [1], [0, 0, 1, 1], [], []>} : vector<8x128xf32>, vector<128x128xf32>, vector<8x128xf32> -> vector<8x128xf32>
    %11 = vector.broadcast %9 : vector<1x128xf32> to vector<8x128xf32>
    %12 = arith.addf %10, %11 : vector<8x128xf32>
    %cst_11 = arith.constant 0.000000e+00 : f32
    %13 = vector.broadcast %cst_11 : f32 to vector<8x128xf32>
    %14 = arith.maximumf %12, %13 : vector<8x128xf32>
    %c0_12 = arith.constant 0 : index
    %c0_13 = arith.constant 0 : index
    %15 = vector.load %arg5[%c0_12, %c0_13] : memref<128x4xf32, #tpu.memory_space<vmem>>, vector<128x4xf32>
    %c0_14 = arith.constant 0 : index
    %c0_15 = arith.constant 0 : index
    %16 = vector.load %arg6[%c0_14, %c0_15] : memref<1x4xf32, #tpu.memory_space<vmem>>, vector<1x4xf32>
    %cst_16 = arith.constant dense<0.000000e+00> : vector<8x4xf32>
    %17 = tpu.matmul %14, %15, %cst_16 {dimension_numbers = #tpu.dot_dimension_numbers<[1], [0], [0], [1], [0, 0, 1, 1], [], []>} : vector<8x128xf32>, vector<128x4xf32>, vector<8x4xf32> -> vector<8x4xf32>
    %18 = vector.broadcast %16 : vector<1x4xf32> to vector<8x4xf32>
    %19 = arith.addf %17, %18 : vector<8x4xf32>
    %c0_17 = arith.constant 0 : index
    %c0_18 = arith.constant 0 : index
    %20 = vector.load %arg7[%c0_17, %c0_18] : memref<8x4xf32, #tpu.memory_space<vmem>>, vector<8x4xf32>
    tpu.vector_store %arg7[%c0_17, %c0_18], %19 {strides = array<i32>} : memref<8x4xf32, #tpu.memory_space<vmem>>, vector<8x4xf32>,
    return
  }
}

</mosaic_0001>

<llo_original>
// kernel: policy_forward.1
$region0: #{policy_forward.1}
  #allocation0 [shape = 'u32[]', space=smem, size = 0x4, offset = 0x4, fixed_abs, tag = 'smem constant byte address 0x4 - core index']
  #allocation1 [shape = 'u32[144,128]{1,0:T(1,128)}', space=vmem, size = 0x12000, scoped, tag = 'internal scratch']
  %s0 = inlined_call_operand.vmem [shape: f32[8,16], index: 0, kind: input, shape index: {}]
  %s1 = inlined_call_operand.hbm [shape: f32[16,128], index: 1, kind: input, shape index: {}]
  %s2 = inlined_call_operand.vmem [shape: f32[1,128], index: 2, kind: input, shape index: {}]
  %s3 = inlined_call_operand.vmem [shape: f32[128,128], index: 3, kind: input, shape index: {}]
  %s4 = inlined_call_operand.vmem [shape: f32[1,128], index: 4, kind: input, shape index: {}]
  %s5 = inlined_call_operand.vmem [shape: f32[128,4], index: 5, kind: input, shape index: {}]
  %s6 = inlined_call_operand.vmem [shape: f32[1,4], index: 6, kind: input, shape index: {}]
  %s7 = inlined_call_operand.vmem [shape: f32[8,4], index: 7, kind: output, shape index: {}]
  %s8 = sld [smem:[#allocation0]]
  $region42: #{policy_forward.1} parent=0
    _
  %s10 = ssub.s32 1, %s8
  %s11 = scalar_select 0, %s10, %s8
  $region1: #{policy_forward.1} parent=0
    #allocation2 [shape = 'u8[8192]{0}', space=vmem, size = 0x2000, scoped, tag = 'input window, operand 1, single buffered']
    #allocation3 [shape = 's32[1]{0}', space=sflag, size = 0x4, scoped, tag = 'scoped memory for policy_forward.1']
    %12 = vsyncpa [#allocation3], 0
    // Predicated region
    $region2: #{policy_forward.1} parent=1 // pred_check
      _
    $region3: #{policy_forward.1} parent=1 // pred_check_branch
      %14 = sbr.rel (0) target = $region5
    $region4: #{policy_forward.1} parent=1 // pred_region
      _
    $region5: #{policy_forward.1} parent=1 // pred_fallthru
      _
    // Predicated region
    $region6: #{policy_forward.1} parent=1 // pred_check
      _
    $region7: #{policy_forward.1} parent=1 // pred_check_branch
      %16 = sbr.rel (0) target = $region9
    $region8: #{policy_forward.1} parent=1 // pred_region
      %s18 = ssub.s32 256, 256
      %19 = vsyncadd [#allocation3], %s18
      %s20 = sshll.u32 [#allocation2], 4
      %s21 = int_to_ptr.vmem [resolvable:$true] %s20
      %26 = dma.hbm_to_vmem [thread:$0]  %s1, 256, %s21, [#allocation3], 128, 128, 8
    $region9: #{policy_forward.1} parent=1 // pred_fallthru
      _
    // Predicated region
    $region10: #{policy_forward.1} parent=1 // pred_check
      _
    $region11: #{policy_forward.1} parent=1 // pred_check_branch
      %28 = sbr.rel (0) target = $region13
    $region12: #{policy_forward.1} parent=1 // pred_region
      _
    $region13: #{policy_forward.1} parent=1 // pred_fallthru
      _
    // Predicated region
    $region14: #{policy_forward.1} parent=1 // pred_check
      _
    $region15: #{policy_forward.1} parent=1 // pred_check_branch
      %30 = sbr.rel (0) target = $region17
    $region16: #{policy_forward.1} parent=1 // pred_region
      _
    $region17: #{policy_forward.1} parent=1 // pred_fallthru
      _
    // Predicated region
    $region18: #{policy_forward.1} parent=1 // pred_check
      _
    $region19: #{policy_forward.1} parent=1 // pred_check_branch
      %32 = sbr.rel (0) target = $region21
    $region20: #{policy_forward.1} parent=1 // pred_region
      _
    $region21: #{policy_forward.1} parent=1 // pred_fallthru
      _
    // Predicated region
    $region22: #{policy_forward.1} parent=1 // pred_check
      _
    $region23: #{policy_forward.1} parent=1 // pred_check_branch
      %34 = sbr.rel (0) target = $region25
    $region24: #{policy_forward.1} parent=1 // pred_region
      _
    $region25: #{policy_forward.1} parent=1 // pred_fallthru
      _
    // Predicated region
    $region26: #{policy_forward.1} parent=1 // pred_check
      _
    $region27: #{policy_forward.1} parent=1 // pred_check_branch
      %36 = sbr.rel (0) target = $region29
    $region28: #{policy_forward.1} parent=1 // pred_region
      _
    $region29: #{policy_forward.1} parent=1 // pred_fallthru
      _
    // Predicated region
    $region30: #{policy_forward.1} parent=1 // pred_check
      _
    $region31: #{policy_forward.1} parent=1 // pred_check_branch
      %38 = sbr.rel (0) target = $region33
    $region32: #{policy_forward.1} parent=1 // pred_region
      %39 = dma.done [#allocation3], 256
    $region33: #{policy_forward.1} parent=1 // pred_fallthru
      _
    %v40 = vld [vmem:[%s0] sm:$0xff]
    %v41 = vld [vmem:[#allocation2] sm:$0xff]
    %v42 = vld [vmem:[#allocation2 + $0x8] sm:$0xff]
    %v43 = vld [vmem:[%s2] sm:$0x1]
    %v45 = vlaneseq
    %v46 = vshrl.u32 %v45, 7
    %v47 = vsub.s32 0, %v46
    %v48 = vrot.slane %v43, %v47
    %vm50 = vcmask 130048
    %v52 = vsel %vm50, %v40, 0
    %54 = vmatprep.subr.mxu0 0.0
    %55 = vmatpush1.msra.mxu0 %v41
    %56 = vmatprep.subr.mxu0 0.0
    %57 = vmatpush1.msra.mxu0 %v42
    %58 = vmatprep.subr.mxu0 0.0
    %59 = vmatpush1.msra.mxu0 0.0
    %60 = vmatprep.subr.mxu0 0.0
    %61 = vmatpush1.msra.mxu0 0.0
    %62 = vmatprep.subr.mxu0 0.0
    %63 = vmatpush1.msra.mxu0 0.0
    %64 = vmatprep.subr.mxu0 0.0
    %65 = vmatpush1.msra.mxu0 0.0
    %66 = vmatprep.subr.mxu0 0.0
    %67 = vmatpush1.msra.mxu0 0.0
    %68 = vmatprep.subr.mxu0 0.0
    %69 = vmatpush1.msra.mxu0 0.0
    %70 = vmatprep.subr.mxu0 0.0
    %71 = vmatpush1.msra.mxu0 0.0
    %72 = vmatprep.subr.mxu0 0.0
    %73 = vmatpush1.msra.mxu0 0.0
    %74 = vmatprep.subr.mxu0 0.0
    %75 = vmatpush1.msra.mxu0 0.0
    %76 = vmatprep.subr.mxu0 0.0
    %77 = vmatpush1.msra.mxu0 0.0
    %78 = vmatprep.subr.mxu0 0.0
    %79 = vmatpush1.msra.mxu0 0.0
    %80 = vmatprep.subr.mxu0 0.0
    %81 = vmatpush1.msra.mxu0 0.0
    %82 = vmatprep.subr.mxu0 0.0
    %83 = vmatpush1.msra.mxu0 0.0
    %84 = vmatprep.subr.mxu0 0.0
    %85 = vmatpush1.msra.mxu0 0.0
    %86 = vmatprep.subr.mxu0 0.0
    %87 = vmatpush1.msra.mxu0 0.0
    %88 = vmatprep.subr.mxu0 0.0
    %89 = vmatpush1.msra.mxu0 0.0
    %90 = vmatprep.subr.mxu0 0.0
    %91 = vmatpush1.msra.mxu0 0.0
    %92 = vmatprep.subr.mxu0 0.0
    %93 = vmatpush1.msra.mxu0 0.0
    %94 = vmatprep.subr.mxu0 0.0
    %95 = vmatpush1.msra.mxu0 0.0
    %96 = vmatprep.subr.mxu0 0.0
    %97 = vmatpush1.msra.mxu0 0.0
    %98 = vmatprep.subr.mxu0 0.0
    %99 = vmatpush1.msra.mxu0 0.0
    %100 = vmatprep.subr.mxu0 0.0
    %101 = vmatpush1.msra.mxu0 0.0
    %102 = vmatprep.subr.mxu0 0.0
    %103 = vmatpush1.msra.mxu0 0.0
    %104 = vmatprep.subr.mxu0 0.0
    %105 = vmatpush1.msra.mxu0 0.0
    %106 = vmatprep.subr.mxu0 0.0
    %107 = vmatpush1.msra.mxu0 0.0
    %108 = vmatprep.subr.mxu0 0.0
    %109 = vmatpush1.msra.mxu0 0.0
    %110 = vmatprep.subr.mxu0 0.0
    %111 = vmatpush1.msra.mxu0 0.0
    %112 = vmatprep.subr.mxu0 0.0
    %113 = vmatpush1.msra.mxu0 0.0
    %114 = vmatprep.subr.mxu0 0.0
    %115 = vmatpush1.msra.mxu0 0.0
    %116 = vmatprep.subr.mxu0 0.0
    %117 = vmatpush1.msra.mxu0 0.0
    %118 = vmatprep.mubr.f32.mxu0 0.0
    %119 = vmatmul.mubr.f32.gmra.mrb[0].mxu0 %v52
    %v120 = vpop.f32.mrb[0].mxu0
    %v121 = vadd.f32 %v48, %v120
    %v122 = vpop.f32.mrb[0].mxu0
    %123 = vdwg.mxu0
    %v124 = vmax.f32 %v121, 0.0
    %v125 = vld [vmem:[%s3] sm:$0xff]
    %v126 = vld [vmem:[%s3 + $0x8] sm:$0xff]
    %v127 = vld [vmem:[%s3 + $0x10] sm:$0xff]
    %v128 = vld [vmem:[%s3 + $0x18] sm:$0xff]
    %v129 = vld [vmem:[%s3 + $0x20] sm:$0xff]
    %v130 = vld [vmem:[%s3 + $0x28] sm:$0xff]
    %v131 = vld [vmem:[%s3 + $0x30] sm:$0xff]
    %v132 = vld [vmem:[%s3 + $0x38] sm:$0xff]
    %v133 = vld [vmem:[%s3 + $0x40] sm:$0xff]
    %v134 = vld [vmem:[%s3 + $0x48] sm:$0xff]
    %v135 = vld [vmem:[%s3 + $0x50] sm:$0xff]
    %v136 = vld [vmem:[%s3 + $0x58] sm:$0xff]
    %v137 = vld [vmem:[%s3 + $0x60] sm:$0xff]
    %v138 = vld [vmem:[%s3 + $0x68] sm:$0xff]
    %v139 = vld [vmem:[%s3 + $0x70] sm:$0xff]
    %v140 = vld [vmem:[%s3 + $0x78] sm:$0xff]
    %v141 = vld [vmem:[%s4] sm:$0x1]
    %v143 = vlaneseq
    %v144 = vshrl.u32 %v143, 7
    %v145 = vsub.s32 0, %v144
    %v146 = vrot.slane %v141, %v145
    %148 = vmatprep.subr.mxu0 0.0
    %149 = vmatpush1.msra.mxu0 %v125
    %150 = vmatprep.subr.mxu0 0.0
    %151 = vmatpush1.msra.mxu0 %v126
    %152 = vmatprep.subr.mxu0 0.0
    %153 = vmatpush1.msra.mxu0 %v127
    %154 = vmatprep.subr.mxu0 0.0
    %155 = vmatpush1.msra.mxu0 %v128
    %156 = vmatprep.subr.mxu0 0.0
    %157 = vmatpush1.msra.mxu0 %v129
    %158 = vmatprep.subr.mxu0 0.0
    %159 = vmatpush1.msra.mxu0 %v130
    %160 = vmatprep.subr.mxu0 0.0
    %161 = vmatpush1.msra.mxu0 %v131
    %162 = vmatprep.subr.mxu0 0.0
    %163 = vmatpush1.msra.mxu0 %v132
    %164 = vmatprep.subr.mxu0 0.0
    %165 = vmatpush1.msra.mxu0 %v133
    %166 = vmatprep.subr.mxu0 0.0
    %167 = vmatpush1.msra.mxu0 %v134
    %168 = vmatprep.subr.mxu0 0.0
    %169 = vmatpush1.msra.mxu0 %v135
    %170 = vmatprep.subr.mxu0 0.0
    %171 = vmatpush1.msra.mxu0 %v136
    %172 = vmatprep.subr.mxu0 0.0
    %173 = vmatpush1.msra.mxu0 %v137
    %174 = vmatprep.subr.mxu0 0.0
    %175 = vmatpush1.msra.mxu0 %v138
    %176 = vmatprep.subr.mxu0 0.0
    %177 = vmatpush1.msra.mxu0 %v139
    %178 = vmatprep.subr.mxu0 0.0
    %179 = vmatpush1.msra.mxu0 %v140
    %180 = vmatprep.subr.mxu0 0.0
    %181 = vmatpush1.msra.mxu0 0.0
    %182 = vmatprep.subr.mxu0 0.0
    %183 = vmatpush1.msra.mxu0 0.0
    %184 = vmatprep.subr.mxu0 0.0
    %185 = vmatpush1.msra.mxu0 0.0
    %186 = vmatprep.subr.mxu0 0.0
    %187 = vmatpush1.msra.mxu0 0.0
    %188 = vmatprep.subr.mxu0 0.0
    %189 = vmatpush1.msra.mxu0 0.0
    %190 = vmatprep.subr.mxu0 0.0
    %191 = vmatpush1.msra.mxu0 0.0
    %192 = vmatprep.subr.mxu0 0.0
    %193 = vmatpush1.msra.mxu0 0.0
    %194 = vmatprep.subr.mxu0 0.0
    %195 = vmatpush1.msra.mxu0 0.0
    %196 = vmatprep.subr.mxu0 0.0
    %197 = vmatpush1.msra.mxu0 0.0
    %198 = vmatprep.subr.mxu0 0.0
    %199 = vmatpush1.msra.mxu0 0.0
    %200 = vmatprep.subr.mxu0 0.0
    %201 = vmatpush1.msra.mxu0 0.0
    %202 = vmatprep.subr.mxu0 0.0
    %203 = vmatpush1.msra.mxu0 0.0
    %204 = vmatprep.subr.mxu0 0.0
    %205 = vmatpush1.msra.mxu0 0.0
    %206 = vmatprep.subr.mxu0 0.0
    %207 = vmatpush1.msra.mxu0 0.0
    %208 = vmatprep.subr.mxu0 0.0
    %209 = vmatpush1.msra.mxu0 0.0
    %210 = vmatprep.subr.mxu0 0.0
    %211 = vmatpush1.msra.mxu0 0.0
    %212 = vmatprep.mubr.f32.mxu0 0.0
    %213 = vmatmul.mubr.f32.gmra.mrb[0].mxu0 %v124
    %v214 = vpop.f32.mrb[0].mxu0
    %v215 = vadd.f32 %v146, %v214
    %v216 = vpop.f32.mrb[0].mxu0
    %217 = vdwg.mxu0
    %v218 = vmax.f32 %v215, 0.0
    %v219 = vld [vmem:[%s5] sm:$0xff]
    %v220 = vld [vmem:[%s5 + $0x8] sm:$0xff]
    %v221 = vld [vmem:[%s5 + $0x10] sm:$0xff]
    %v222 = vld [vmem:[%s5 + $0x18] sm:$0xff]
    %v223 = vld [vmem:[%s5 + $0x20] sm:$0xff]
    %v224 = vld [vmem:[%s5 + $0x28] sm:$0xff]
    %v225 = vld [vmem:[%s5 + $0x30] sm:$0xff]
    %v226 = vld [vmem:[%s5 + $0x38] sm:$0xff]
    %v227 = vld [vmem:[%s5 + $0x40] sm:$0xff]
    %v228 = vld [vmem:[%s5 + $0x48] sm:$0xff]
    %v229 = vld [vmem:[%s5 + $0x50] sm:$0xff]
    %v230 = vld [vmem:[%s5 + $0x58] sm:$0xff]
    %v231 = vld [vmem:[%s5 + $0x60] sm:$0xff]
    %v232 = vld [vmem:[%s5 + $0x68] sm:$0xff]
    %v233 = vld [vmem:[%s5 + $0x70] sm:$0xff]
    %v234 = vld [vmem:[%s5 + $0x78] sm:$0xff]
    %v235 = vld [vmem:[%s6] sm:$0x1]
    %v237 = vlaneseq
    %v238 = vshrl.u32 %v237, 7
    %v239 = vsub.s32 0, %v238
    %v240 = vrot.slane %v235, %v239
    %242 = vmatprep.subr.mxu0 0.0
    %243 = vmatpush1.msra.mxu0 %v219
    %244 = vmatprep.subr.mxu0 0.0
    %245 = vmatpush1.msra.mxu0 %v220
    %246 = vmatprep.subr.mxu0 0.0
    %247 = vmatpush1.msra.mxu0 %v221
    %248 = vmatprep.subr.mxu0 0.0
    %249 = vmatpush1.msra.mxu0 %v222
    %250 = vmatprep.subr.mxu0 0.0
    %251 = vmatpush1.msra.mxu0 %v223
    %252 = vmatprep.subr.mxu0 0.0
    %253 = vmatpush1.msra.mxu0 %v224
    %254 = vmatprep.subr.mxu0 0.0
    %255 = vmatpush1.msra.mxu0 %v225
    %256 = vmatprep.subr.mxu0 0.0
    %257 = vmatpush1.msra.mxu0 %v226
    %258 = vmatprep.subr.mxu0 0.0
    %259 = vmatpush1.msra.mxu0 %v227
    %260 = vmatprep.subr.mxu0 0.0
    %261 = vmatpush1.msra.mxu0 %v228
    %262 = vmatprep.subr.mxu0 0.0
    %263 = vmatpush1.msra.mxu0 %v229
    %264 = vmatprep.subr.mxu0 0.0
    %265 = vmatpush1.msra.mxu0 %v230
    %266 = vmatprep.subr.mxu0 0.0
    %267 = vmatpush1.msra.mxu0 %v231
    %268 = vmatprep.subr.mxu0 0.0
    %269 = vmatpush1.msra.mxu0 %v232
    %270 = vmatprep.subr.mxu0 0.0
    %271 = vmatpush1.msra.mxu0 %v233
    %272 = vmatprep.subr.mxu0 0.0
    %273 = vmatpush1.msra.mxu0 %v234
    %274 = vmatprep.subr.mxu0 0.0
    %275 = vmatpush1.msra.mxu0 0.0
    %276 = vmatprep.subr.mxu0 0.0
    %277 = vmatpush1.msra.mxu0 0.0
    %278 = vmatprep.subr.mxu0 0.0
    %279 = vmatpush1.msra.mxu0 0.0
    %280 = vmatprep.subr.mxu0 0.0
    %281 = vmatpush1.msra.mxu0 0.0
    %282 = vmatprep.subr.mxu0 0.0
    %283 = vmatpush1.msra.mxu0 0.0
    %284 = vmatprep.subr.mxu0 0.0
    %285 = vmatpush1.msra.mxu0 0.0
    %286 = vmatprep.subr.mxu0 0.0
    %287 = vmatpush1.msra.mxu0 0.0
    %288 = vmatprep.subr.mxu0 0.0
    %289 = vmatpush1.msra.mxu0 0.0
    %290 = vmatprep.subr.mxu0 0.0
    %291 = vmatpush1.msra.mxu0 0.0
    %292 = vmatprep.subr.mxu0 0.0
    %293 = vmatpush1.msra.mxu0 0.0
    %294 = vmatprep.subr.mxu0 0.0
    %295 = vmatpush1.msra.mxu0 0.0
    %296 = vmatprep.subr.mxu0 0.0
    %297 = vmatpush1.msra.mxu0 0.0
    %298 = vmatprep.subr.mxu0 0.0
    %299 = vmatpush1.msra.mxu0 0.0
    %300 = vmatprep.subr.mxu0 0.0
    %301 = vmatpush1.msra.mxu0 0.0
    %302 = vmatprep.subr.mxu0 0.0
    %303 = vmatpush1.msra.mxu0 0.0
    %304 = vmatprep.subr.mxu0 0.0
    %305 = vmatpush1.msra.mxu0 0.0
    %306 = vmatprep.mubr.f32.mxu0 0.0
    %307 = vmatmul.mubr.f32.gmra.mrb[0].mxu0 %v218
    %v308 = vpop.f32.mrb[0].mxu0
    %v309 = vadd.f32 %v240, %v308
    %v310 = vpop.f32.mrb[0].mxu0
    %311 = vdwg.mxu0
    %vm312 = vcmask 31744
    %313 = vst.msk [vmem:[%s7] sm:$0xff] %vm312, %v309
    // Predicated region
    $region34: #{policy_forward.1} parent=1 // pred_check
      _
    $region35: #{policy_forward.1} parent=1 // pred_check_branch
      %315 = sbr.rel (0) target = $region37
    $region36: #{policy_forward.1} parent=1 // pred_region
      _
    $region37: #{policy_forward.1} parent=1 // pred_fallthru
      _
    // Predicated region
    $region38: #{policy_forward.1} parent=1 // pred_check
      _
    $region39: #{policy_forward.1} parent=1 // pred_check_branch
      %317 = sbr.rel (0) target = $region41
    $region40: #{policy_forward.1} parent=1 // pred_region
      _
    $region41: #{policy_forward.1} parent=1 // pred_fallthru
      _
    %318 = vsyncpa [#allocation3], 1

</llo_original>
